<compile_context>
chip_gen: v6e
topology: v6e:2x2x1
jax: 0.10.0
libtpu: 0.0.40
codegen_flags: <defaults>
</compile_context>

<pallas_src>
import jax
import jax.numpy as jnp
from jax.experimental import pallas as pl
from jax.experimental.pallas import tpu as pltpu

HIDDEN = 64
LANE = 128


def _round_up(x, m):
    return (x + m - 1) // m * m


def _default_tile_n(p_pad):
    # Largest tile in {2048, 1024, 512, 256, 128} that divides p_pad
    # (p_pad is always a multiple of 128, so 128 always works).
    for tn in (16 * LANE, 8 * LANE, 4 * LANE, 2 * LANE, LANE):
        if p_pad % tn == 0:
            return tn
    return LANE


def _generator_kernel(p_ref, q_ref, w1p_ref, w1q_ref, b1_ref, w2_ref, b2_ref, out_ref):
    # p_ref : (B, P)    q_ref : (B, Q)
    # w1p_ref: (P, 64)  w1q_ref: (Q, 64)  b1_ref: (1, 64)
    # w2_ref : (64, TN) b2_ref : (1, TN)  out_ref: (B, TN)
    #
    # First layer: concat folded into a split matmul (cheap: B x (P+Q) x 64).
    # Recomputed per P-tile so every grid step is independent ("parallel"-safe).
    h = (
        jnp.dot(p_ref[...], w1p_ref[...], preferred_element_type=jnp.float32)
        + jnp.dot(q_ref[...], w1q_ref[...], preferred_element_type=jnp.float32)
        + b1_ref[...]
    )
    h = jnp.maximum(h, 0.0)  # ReLU, fused on the f32 accumulator (free VPU slots)
    y = jnp.dot(h, w2_ref[...], preferred_element_type=jnp.float32) + b2_ref[...]
    out_ref[...] = y.astype(out_ref.dtype)


def init_generator_params(key, p_dim, q_dim, hidden=HIDDEN, weight_dtype=jnp.float32):
    """nn.Linear-style init U(-1/sqrt(in), 1/sqrt(in)).

    Weights are stored as (in_features, out_features); W1 is pre-split into the
    parameter / probability halves and W2/b2 are zero-padded to a lane-dense
    multiple of 128 on the output axis. All casting / splitting / padding
    happens ONCE here so the per-call wrapper issues no extra XLA ops.
    (Set weight_dtype=jnp.bfloat16 to halve W2 HBM traffic for large P; the
    MXU accumulates in f32 either way.)
    """
    n = p_dim + q_dim
    k1w, k1b, k2w, k2b = jax.random.split(key, 4)
    bound1 = 1.0 / jnp.sqrt(jnp.float32(n))
    w1 = jax.random.uniform(k1w, (n, hidden), jnp.float32, -bound1, bound1)
    b1 = jax.random.uniform(k1b, (hidden,), jnp.float32, -bound1, bound1)
    bound2 = 1.0 / jnp.sqrt(jnp.float32(hidden))
    w2 = jax.random.uniform(k2w, (hidden, p_dim), jnp.float32, -bound2, bound2)
    b2 = jax.random.uniform(k2b, (p_dim,), jnp.float32, -bound2, bound2)

    p_pad = _round_up(p_dim, LANE)
    w2_padded = jnp.zeros((hidden, p_pad), weight_dtype).at[:, :p_dim].set(
        w2.astype(weight_dtype)
    )
    b2_padded = jnp.zeros((1, p_pad), jnp.float32).at[:, :p_dim].set(b2)

    params = dict(
        w1p=w1[:p_dim].astype(weight_dtype),   # (P, 64)
        w1q=w1[p_dim:].astype(weight_dtype),   # (Q, 64)
        b1=b1.reshape(1, hidden),              # (1, 64)
        w2=w2_padded,                          # (64, P_pad)
        b2=b2_padded,                          # (1, P_pad)
        p_dim=p_dim,
        q_dim=q_dim,
        p_pad=p_pad,
    )
    # Unsplit / unpadded copies, only for the plain-JAX reference check.
    ref = dict(w1=w1, b1=b1, w2=w2, b2=b2)
    return params, ref


def generator_forward(parameters, probabilities, params, *, tile_n=None):
    """parameters: (P,) or (B, P); probabilities: (Q,) or (B, Q).

    Returns (P,) or (B, P): relu(cat(p, q) @ W1 + b1) @ W2 + b2, matching
    Generator.forward row-wise.
    """
    squeeze = parameters.ndim == 1
    p = jnp.atleast_2d(parameters).astype(jnp.float32)      # (B, P)
    q = jnp.atleast_2d(probabilities).astype(jnp.float32)   # (B, Q)
    b = p.shape[0]
    p_dim, q_dim, p_pad = params["p_dim"], params["q_dim"], params["p_pad"]
    assert p.shape[1] == p_dim and q.shape[1] == q_dim and q.shape[0] == b

    tn = _default_tile_n(p_pad) if tile_n is None else tile_n
    assert tn % LANE == 0 and p_pad % tn == 0
    grid = (p_pad // tn,)

    full = lambda j: (0, 0)
    tiled = lambda j: (0, j)

    operands = (p, q, params["w1p"], params["w1q"], params["b1"],
                params["w2"], params["b2"])
    cost = pl.CostEstimate(
        flops=2 * b * ((p_dim + q_dim) * HIDDEN + HIDDEN * p_pad),
        transcendentals=0,
        bytes_accessed=int(
            sum(a.size * a.dtype.itemsize for a in operands) + b * p_pad * 4
        ),
    )

    out = pl.pallas_call(
        _generator_kernel,
        out_shape=jax.ShapeDtypeStruct((b, p_pad), jnp.float32),
        grid_spec=pltpu.PrefetchScalarGridSpec(
            num_scalar_prefetch=0,
            grid=grid,
            in_specs=[
                pl.BlockSpec((b, p_dim), full),        # parameters
                pl.BlockSpec((b, q_dim), full),        # probabilities
                pl.BlockSpec((p_dim, HIDDEN), full),   # W1[:P]
                pl.BlockSpec((q_dim, HIDDEN), full),   # W1[P:]
                pl.BlockSpec((1, HIDDEN), full),       # b1
                pl.BlockSpec((HIDDEN, tn), tiled),     # W2 tile
                pl.BlockSpec((1, tn), tiled),          # b2 tile
            ],
            out_specs=pl.BlockSpec((b, tn), tiled),
        ),
        compiler_params=pltpu.CompilerParams(
            dimension_semantics=("parallel",),
        ),
        cost_estimate=cost,
    )(*operands)

    out = out[:, :p_dim]
    return out[0] if squeeze else out


if __name__ == "__main__":
    key = jax.random.PRNGKey(0)
    k_p, k_q, k_w = jax.random.split(key, 3)

    # Shapes consistent with the module's __init__ (Linear(20,64), Linear(64,10)):
    # P = Q = 10 so cat length is 20.  B = 8 batched forwards (f32 sublane-aligned).
    P, Q, B = 10, 10, 8
    parameters = jax.random.normal(k_p, (B, P), jnp.float32)
    probabilities = jax.random.normal(k_q, (B, Q), jnp.float32)

    # The PyTorch module re-creates fc1/fc2 with fresh random init every forward;
    # here the weights are drawn once, deterministically (same forward math).
    # TODO(synk): in-kernel pltpu.prng_seed/prng_random_bits weight re-init if
    # per-call fresh-weight semantics are actually required downstream.
    params, ref_w = init_generator_params(k_w, P, Q)

    # Batched forward through the kernel.
    out = generator_forward(parameters, probabilities, params)
    jax.block_until_ready(out)

    # Plain-JAX reference of the same math (concat + two Linears + ReLU).
    x_ref = jnp.concatenate([parameters, probabilities], axis=1)
    ref = jnp.maximum(x_ref @ ref_w["w1"] + ref_w["b1"], 0.0) @ ref_w["w2"] + ref_w["b2"]
    assert out.shape == (B, P)
    assert jnp.allclose(out, ref, atol=1e-5, rtol=1e-5)

    # Single-vector path, identical to the original forward(parameters, probabilities).
    out1 = generator_forward(parameters[0], probabilities[0], params)
    jax.block_until_ready(out1)
    assert out1.shape == (P,)
    assert jnp.allclose(out1, ref[0], atol=1e-5, rtol=1e-5)

    print("KERNEL_OK")
</pallas_src>

<mosaic_0001>
module attributes {stable_mosaic.version = 11 : i64} {
  func.func @_generator_kernel(%arg0: i32, %arg1: memref<8x10xf32, #tpu.memory_space<vmem>>, %arg2: memref<8x10xf32, #tpu.memory_space<vmem>>, %arg3: memref<10x64xf32, #tpu.memory_space<vmem>>, %arg4: memref<10x64xf32, #tpu.memory_space<vmem>>, %arg5: memref<1x64xf32, #tpu.memory_space<vmem>>, %arg6: memref<64x128xf32, #tpu.memory_space<vmem>>, %arg7: memref<1x128xf32, #tpu.memory_space<vmem>>, %arg8: memref<8x128xf32, #tpu.memory_space<vmem>>) attributes {dimension_semantics = [#tpu.dimension_semantics<parallel>], iteration_bounds = array<i64: 1>, scalar_prefetch = 0 : i64, scratch_operands = 0 : i64, tpu.core_type = #tpu.core_type<tc>, window_params = [{pipeline_mode = #tpu.pipeline_mode<synchronous>, transform_indices = @transform_0, window_bounds = array<i64: 8, 10>}, {pipeline_mode = #tpu.pipeline_mode<synchronous>, transform_indices = @transform_1, window_bounds = array<i64: 8, 10>}, {pipeline_mode = #tpu.pipeline_mode<synchronous>, transform_indices = @transform_2, window_bounds = array<i64: 10, 64>}, {pipeline_mode = #tpu.pipeline_mode<synchronous>, transform_indices = @transform_3, window_bounds = array<i64: 10, 64>}, {pipeline_mode = #tpu.pipeline_mode<synchronous>, transform_indices = @transform_4, window_bounds = array<i64: 1, 64>}, {transform_indices = @transform_5, window_bounds = array<i64: 64, 128>}, {transform_indices = @transform_6, window_bounds = array<i64: 1, 128>}, {transform_indices = @transform_7, window_bounds = array<i64: 8, 128>}]} {
    %c0 = arith.constant 0 : index
    %c0_0 = arith.constant 0 : index
    %0 = vector.load %arg1[%c0, %c0_0] : memref<8x10xf32, #tpu.memory_space<vmem>>, vector<8x10xf32>
    %c0_1 = arith.constant 0 : index
    %c0_2 = arith.constant 0 : index
    %1 = vector.load %arg3[%c0_1, %c0_2] : memref<10x64xf32, #tpu.memory_space<vmem>>, vector<10x64xf32>
    %cst = arith.constant dense<0.000000e+00> : vector<8x64xf32>
    %2 = tpu.matmul %0, %1, %cst {dimension_numbers = #tpu.dot_dimension_numbers<[1], [0], [0], [1], [0, 0, 1, 1], [], []>} : vector<8x10xf32>, vector<10x64xf32>, vector<8x64xf32> -> vector<8x64xf32>
    %c0_3 = arith.constant 0 : index
    %c0_4 = arith.constant 0 : index
    %3 = vector.load %arg2[%c0_3, %c0_4] : memref<8x10xf32, #tpu.memory_space<vmem>>, vector<8x10xf32>
    %c0_5 = arith.constant 0 : index
    %c0_6 = arith.constant 0 : index
    %4 = vector.load %arg4[%c0_5, %c0_6] : memref<10x64xf32, #tpu.memory_space<vmem>>, vector<10x64xf32>
    %cst_7 = arith.constant dense<0.000000e+00> : vector<8x64xf32>
    %5 = tpu.matmul %3, %4, %cst_7 {dimension_numbers = #tpu.dot_dimension_numbers<[1], [0], [0], [1], [0, 0, 1, 1], [], []>} : vector<8x10xf32>, vector<10x64xf32>, vector<8x64xf32> -> vector<8x64xf32>
    %6 = arith.addf %2, %5 : vector<8x64xf32>
    %c0_8 = arith.constant 0 : index
    %c0_9 = arith.constant 0 : index
    %7 = vector.load %arg5[%c0_8, %c0_9] : memref<1x64xf32, #tpu.memory_space<vmem>>, vector<1x64xf32>
    %8 = vector.broadcast %7 : vector<1x64xf32> to vector<8x64xf32>
    %9 = arith.addf %6, %8 : vector<8x64xf32>
    %cst_10 = arith.constant 0.000000e+00 : f32
    %10 = vector.broadcast %cst_10 : f32 to vector<8x64xf32>
    %11 = arith.maximumf %9, %10 : vector<8x64xf32>
    %c0_11 = arith.constant 0 : index
    %c0_12 = arith.constant 0 : index
    %12 = vector.load %arg6[%c0_11, %c0_12] : memref<64x128xf32, #tpu.memory_space<vmem>>, vector<64x128xf32>
    %cst_13 = arith.constant dense<0.000000e+00> : vector<8x128xf32>
    %13 = tpu.matmul %11, %12, %cst_13 {dimension_numbers = #tpu.dot_dimension_numbers<[1], [0], [0], [1], [0, 0, 1, 1], [], []>} : vector<8x64xf32>, vector<64x128xf32>, vector<8x128xf32> -> vector<8x128xf32>
    %c0_14 = arith.constant 0 : index
    %c0_15 = arith.constant 0 : index
    %14 = vector.load %arg7[%c0_14, %c0_15] : memref<1x128xf32, #tpu.memory_space<vmem>>, vector<1x128xf32>
    %15 = vector.broadcast %14 : vector<1x128xf32> to vector<8x128xf32>
    %16 = arith.addf %13, %15 : vector<8x128xf32>
    %c0_16 = arith.constant 0 : index
    %c0_17 = arith.constant 0 : index
    %17 = vector.load %arg8[%c0_16, %c0_17] : memref<8x128xf32, #tpu.memory_space<vmem>>, vector<8x128xf32>
    tpu.vector_store %arg8[%c0_16, %c0_17], %16 {strides = array<i32>} : memref<8x128xf32, #tpu.memory_space<vmem>>, vector<8x128xf32>,
    return
  }
  func.func @transform_0(%arg0: i32) -> (i32, i32) {
    %c0_i32 = arith.constant 0 : i32
    %c0_i32_0 = arith.constant 0 : i32
    %c0_i32_1 = arith.constant 0 : i32
    return %c0_i32, %c0_i32_0 : i32, i32
  }
  func.func @transform_1(%arg0: i32) -> (i32, i32) {
    %c0_i32 = arith.constant 0 : i32
    %c0_i32_0 = arith.constant 0 : i32
    %c0_i32_1 = arith.constant 0 : i32
    return %c0_i32, %c0_i32_0 : i32, i32
  }
  func.func @transform_2(%arg0: i32) -> (i32, i32) {
    %c0_i32 = arith.constant 0 : i32
    %c0_i32_0 = arith.constant 0 : i32
    %c0_i32_1 = arith.constant 0 : i32
    return %c0_i32, %c0_i32_0 : i32, i32
  }
  func.func @transform_3(%arg0: i32) -> (i32, i32) {
    %c0_i32 = arith.constant 0 : i32
    %c0_i32_0 = arith.constant 0 : i32
    %c0_i32_1 = arith.constant 0 : i32
    return %c0_i32, %c0_i32_0 : i32, i32
  }
  func.func @transform_4(%arg0: i32) -> (i32, i32) {
    %c0_i32 = arith.constant 0 : i32
    %c0_i32_0 = arith.constant 0 : i32
    %c0_i32_1 = arith.constant 0 : i32
    return %c0_i32, %c0_i32_0 : i32, i32
  }
  func.func @transform_5(%arg0: i32) -> (i32, i32) {
    %c0_i32 = arith.constant 0 : i32
    %c0_i32_0 = arith.constant 0 : i32
    return %c0_i32, %arg0 : i32, i32
  }
  func.func @transform_6(%arg0: i32) -> (i32, i32) {
    %c0_i32 = arith.constant 0 : i32
    %c0_i32_0 = arith.constant 0 : i32
    return %c0_i32, %arg0 : i32, i32
  }
  func.func @transform_7(%arg0: i32) -> (i32, i32) {
    %c0_i32 = arith.constant 0 : i32
    %c0_i32_0 = arith.constant 0 : i32
    return %c0_i32, %arg0 : i32, i32
  }
}

</mosaic_0001>

<llo_original>
// kernel: tpu_custom_call.1
$region0: #{tpu_custom_call.1}
  #allocation0 [shape = 'u32[]', space=smem, size = 0x4, offset = 0x4, fixed_abs, tag = 'smem constant byte address 0x4 - core index']
  #allocation1 [shape = 'u32[144,128]{1,0:T(1,128)}', space=vmem, size = 0x12000, scoped, tag = 'internal scratch']
  %s0 = inlined_call_operand.hbm [shape: f32[8,10], index: 0, kind: input, shape index: {}]
  %s1 = inlined_call_operand.hbm [shape: f32[8,10], index: 1, kind: input, shape index: {}]
  %s2 = inlined_call_operand.hbm [shape: f32[10,64], index: 2, kind: input, shape index: {}]
  %s3 = inlined_call_operand.hbm [shape: f32[10,64], index: 3, kind: input, shape index: {}]
  %s4 = inlined_call_operand.vmem [shape: f32[1,64], index: 4, kind: input, shape index: {}]
  %s5 = inlined_call_operand.hbm [shape: f32[64,128], index: 5, kind: input, shape index: {}]
  %s6 = inlined_call_operand.vmem [shape: f32[1,128], index: 6, kind: input, shape index: {}]
  %s7 = inlined_call_operand.hbm [shape: f32[8,128], index: 7, kind: output, shape index: {}]
  %s8 = sld [smem:[#allocation0]]
  $region58: #{tpu_custom_call.1} parent=0
    _
  %s10 = ssub.s32 1, %s8
  %s11 = scalar_select 0, %s10, %s8
  $region1: #{tpu_custom_call.1} parent=0
    #allocation2 [shape = 'u8[4096]{0}', space=vmem, size = 0x1000, scoped, tag = 'input window, operand 0, single buffered']
    #allocation3 [shape = 's32[1]{0}', space=sflag, size = 0x4, scoped, tag = 'scoped memory for tpu_custom_call.1']
    #allocation4 [shape = 's32[1]{0}', space=sflag, size = 0x4, scoped, tag = 'scoped memory for tpu_custom_call.1']
    #allocation5 [shape = 'u8[4096]{0}', space=vmem, size = 0x1000, scoped, tag = 'input window, operand 1, single buffered']
    #allocation6 [shape = 's32[1]{0}', space=sflag, size = 0x4, scoped, tag = 'scoped memory for tpu_custom_call.1']
    #allocation7 [shape = 'u8[8192]{0}', space=vmem, size = 0x2000, scoped, tag = 'input window, operand 2, single buffered']
    #allocation8 [shape = 'u8[8192]{0}', space=vmem, size = 0x2000, scoped, tag = 'input window, operand 3, single buffered']
    #allocation9 [shape = 's32[1]{0}', space=sflag, size = 0x4, scoped, tag = 'scoped memory for tpu_custom_call.1']
    #allocation10 [shape = 'u8[32768]{0}', space=vmem, size = 0x8000, scoped, tag = 'input window, operand 5, single buffered']
    #allocation11 [shape = 'u8[4096]{0}', space=vmem, size = 0x1000, scoped, tag = 'output window, operand 0, single buffered']
    %12 = vsyncpa [#allocation3], 0
    %13 = vsyncpa [#allocation6], 0
    %14 = vsyncpa [#allocation9], 0
    %15 = vsyncpa [#allocation4], 0
    // Predicated region
    $region2: #{tpu_custom_call.1} parent=1 // pred_check
      _
    $region3: #{tpu_custom_call.1} parent=1 // pred_check_branch
      %17 = sbr.rel (0) target = $region5
    $region4: #{tpu_custom_call.1} parent=1 // pred_region
      %s19 = ssub.s32 128, 128
      %20 = vsyncadd [#allocation3], %s19
      %s22 = sshll.u32 [#allocation2], 4
      %s23 = int_to_ptr.vmem [resolvable:$true] %s22
      %25 = dma.hbm_to_vmem [thread:$0]  %s0, 128, %s23, [#allocation3]
    $region5: #{tpu_custom_call.1} parent=1 // pred_fallthru
      _
    // Predicated region
    $region6: #{tpu_custom_call.1} parent=1 // pred_check
      _
    $region7: #{tpu_custom_call.1} parent=1 // pred_check_branch
      %27 = sbr.rel (0) target = $region9
    $region8: #{tpu_custom_call.1} parent=1 // pred_region
      %s29 = ssub.s32 128, 128
      %30 = vsyncadd [#allocation6], %s29
      %s32 = sshll.u32 [#allocation5], 4
      %s33 = int_to_ptr.vmem [resolvable:$true] %s32
      %35 = dma.hbm_to_vmem [thread:$0]  %s1, 128, %s33, [#allocation6]
    $region9: #{tpu_custom_call.1} parent=1 // pred_fallthru
      _
    // Predicated region
    $region10: #{tpu_custom_call.1} parent=1 // pred_check
      _
    $region11: #{tpu_custom_call.1} parent=1 // pred_check_branch
      %37 = sbr.rel (0) target = $region13
    $region12: #{tpu_custom_call.1} parent=1 // pred_region
      %s39 = ssub.s32 256, 256
      %40 = vsyncadd [#allocation6], %s39
      %s41 = sshll.u32 [#allocation7], 4
      %s42 = int_to_ptr.vmem [resolvable:$true] %s41
      %47 = dma.hbm_to_vmem [thread:$0]  %s2, 256, %s42, [#allocation6], 128, 128, 8
    $region13: #{tpu_custom_call.1} parent=1 // pred_fallthru
      _
    // Predicated region
    $region14: #{tpu_custom_call.1} parent=1 // pred_check
      _
    $region15: #{tpu_custom_call.1} parent=1 // pred_check_branch
      %49 = sbr.rel (0) target = $region17
    $region16: #{tpu_custom_call.1} parent=1 // pred_region
      %s51 = ssub.s32 256, 256
      %52 = vsyncadd [#allocation9], %s51
      %s53 = sshll.u32 [#allocation8], 4
      %s54 = int_to_ptr.vmem [resolvable:$true] %s53
      %59 = dma.hbm_to_vmem [thread:$0]  %s3, 256, %s54, [#allocation9], 128, 128, 8
    $region17: #{tpu_custom_call.1} parent=1 // pred_fallthru
      _
    // Predicated region
    $region18: #{tpu_custom_call.1} parent=1 // pred_check
      _
    $region19: #{tpu_custom_call.1} parent=1 // pred_check_branch
      %61 = sbr.rel (0) target = $region21
    $region20: #{tpu_custom_call.1} parent=1 // pred_region
      _
    $region21: #{tpu_custom_call.1} parent=1 // pred_fallthru
      _
    // Predicated region
    $region22: #{tpu_custom_call.1} parent=1 // pred_check
      _
    $region23: #{tpu_custom_call.1} parent=1 // pred_check_branch
      %63 = sbr.rel (0) target = $region25
    $region24: #{tpu_custom_call.1} parent=1 // pred_region
      %s65 = ssub.s32 1024, 1024
      %66 = vsyncadd [#allocation9], %s65
      %s67 = sshll.u32 [#allocation10], 4
      %s68 = int_to_ptr.vmem [resolvable:$true] %s67
      %73 = dma.hbm_to_vmem [thread:$0]  %s5, 1024, %s68, [#allocation9], 128, 128, 8
    $region25: #{tpu_custom_call.1} parent=1 // pred_fallthru
      _
    // Predicated region
    $region26: #{tpu_custom_call.1} parent=1 // pred_check
      _
    $region27: #{tpu_custom_call.1} parent=1 // pred_check_branch
      %75 = sbr.rel (0) target = $region29
    $region28: #{tpu_custom_call.1} parent=1 // pred_region
      _
    $region29: #{tpu_custom_call.1} parent=1 // pred_fallthru
      _
    // Predicated region
    $region30: #{tpu_custom_call.1} parent=1 // pred_check
      _
    $region31: #{tpu_custom_call.1} parent=1 // pred_check_branch
      %77 = sbr.rel (0) target = $region33
    $region32: #{tpu_custom_call.1} parent=1 // pred_region
      %78 = dma.done [#allocation3], 128
    $region33: #{tpu_custom_call.1} parent=1 // pred_fallthru
      _
    // Predicated region
    $region34: #{tpu_custom_call.1} parent=1 // pred_check
      _
    $region35: #{tpu_custom_call.1} parent=1 // pred_check_branch
      %80 = sbr.rel (0) target = $region37
    $region36: #{tpu_custom_call.1} parent=1 // pred_region
      %81 = dma.done [#allocation6], 128
    $region37: #{tpu_custom_call.1} parent=1 // pred_fallthru
      _
    // Predicated region
    $region38: #{tpu_custom_call.1} parent=1 // pred_check
      _
    $region39: #{tpu_custom_call.1} parent=1 // pred_check_branch
      %83 = sbr.rel (0) target = $region41
    $region40: #{tpu_custom_call.1} parent=1 // pred_region
      %84 = dma.done [#allocation6], 256
    $region41: #{tpu_custom_call.1} parent=1 // pred_fallthru
      _
    // Predicated region
    $region42: #{tpu_custom_call.1} parent=1 // pred_check
      _
    $region43: #{tpu_custom_call.1} parent=1 // pred_check_branch
      %86 = sbr.rel (0) target = $region45
    $region44: #{tpu_custom_call.1} parent=1 // pred_region
      %87 = dma.done [#allocation9], 256
    $region45: #{tpu_custom_call.1} parent=1 // pred_fallthru
      _
    // Predicated region
    $region46: #{tpu_custom_call.1} parent=1 // pred_check
      _
    $region47: #{tpu_custom_call.1} parent=1 // pred_check_branch
      %89 = sbr.rel (0) target = $region49
    $region48: #{tpu_custom_call.1} parent=1 // pred_region
      %90 = dma.done [#allocation9], 1024
    $region49: #{tpu_custom_call.1} parent=1 // pred_fallthru
      _
    %v91 = vld [vmem:[#allocation2] sm:$0xff]
    %v92 = vld [vmem:[#allocation7] sm:$0xff]
    %v93 = vld [vmem:[#allocation7 + $0x8] sm:$0x3]
    %v94 = vld [vmem:[#allocation5] sm:$0xff]
    %v95 = vld [vmem:[#allocation8] sm:$0xff]
    %v96 = vld [vmem:[#allocation8 + $0x8] sm:$0x3]
    %vm97 = vcmask 80896
    %v99 = vsel %vm97, %v94, 0
    %vm101 = vcmask 1041408
    %v103 = vsel %vm101, %v96, 0
    %105 = vmatprep.subr.mxu0 0.0
    %106 = vmatpush1.msra.mxu0 0.0
    %107 = vmatprep.subr.mxu0 0.0
    %108 = vmatpush1.msra.mxu0 0.0
    %109 = vmatprep.subr.mxu0 0.0
    %110 = vmatpush1.msra.mxu0 0.0
    %111 = vmatprep.subr.mxu0 0.0
    %112 = vmatpush1.msra.mxu0 0.0
    %113 = vmatprep.subr.mxu0 0.0
    %114 = vmatpush1.msra.mxu0 0.0
    %115 = vmatprep.subr.mxu0 0.0
    %116 = vmatpush1.msra.mxu0 0.0
    %117 = vmatprep.subr.mxu0 0.0
    %118 = vmatpush1.msra.mxu0 0.0
    %119 = vmatprep.subr.mxu0 0.0
    %120 = vmatpush1.msra.mxu0 0.0
    %121 = vmatprep.subr.mxu0 0.0
    %122 = vmatpush1.msra.mxu0 0.0
    %123 = vmatprep.subr.mxu0 0.0
    %124 = vmatpush1.msra.mxu0 0.0
    %125 = vmatprep.subr.mxu0 0.0
    %126 = vmatpush1.msra.mxu0 0.0
    %127 = vmatprep.subr.mxu0 0.0
    %128 = vmatpush1.msra.mxu0 0.0
    %129 = vmatprep.subr.mxu0 0.0
    %130 = vmatpush1.msra.mxu0 0.0
    %131 = vmatprep.subr.mxu0 0.0
    %132 = vmatpush1.msra.mxu0 0.0
    %133 = vmatprep.subr.mxu0 0.0
    %134 = vmatpush1.msra.mxu0 %v103
    %135 = vmatprep.subr.mxu0 0.0
    %136 = vmatpush1.msra.mxu0 %v95
    %137 = vmatprep.subr.mxu0 0.0
    %138 = vmatpush2.msra.mxu0 0.0
    %139 = vmatprep.subr.mxu0 0.0
    %140 = vmatpush2.msra.mxu0 0.0
    %141 = vmatprep.subr.mxu0 0.0
    %142 = vmatpush2.msra.mxu0 0.0
    %143 = vmatprep.subr.mxu0 0.0
    %144 = vmatpush2.msra.mxu0 0.0
    %145 = vmatprep.subr.mxu0 0.0
    %146 = vmatpush2.msra.mxu0 0.0
    %147 = vmatprep.subr.mxu0 0.0
    %148 = vmatpush2.msra.mxu0 0.0
    %149 = vmatprep.subr.mxu0 0.0
    %150 = vmatpush2.msra.mxu0 0.0
    %151 = vmatprep.subr.mxu0 0.0
    %152 = vmatpush2.msra.mxu0 0.0
    %153 = vmatprep.subr.mxu0 0.0
    %154 = vmatpush2.msra.mxu0 0.0
    %155 = vmatprep.subr.mxu0 0.0
    %156 = vmatpush2.msra.mxu0 0.0
    %157 = vmatprep.subr.mxu0 0.0
    %158 = vmatpush2.msra.mxu0 0.0
    %159 = vmatprep.subr.mxu0 0.0
    %160 = vmatpush2.msra.mxu0 0.0
    %161 = vmatprep.subr.mxu0 0.0
    %162 = vmatpush2.msra.mxu0 0.0
    %163 = vmatprep.subr.mxu0 0.0
    %164 = vmatpush2.msra.mxu0 0.0
    %165 = vmatprep.subr.mxu0 0.0
    %166 = vmatpush2.msra.mxu0 0.0
    %167 = vmatprep.subr.mxu0 0.0
    %168 = vmatpush2.msra.mxu0 0.0
    %169 = vmatprep.mubr.f32.mxu0 0.0
    %170 = vmatmul.mubr.f32.gmra.mxu0 %v99
    %v171 = vpop.f32.mrf.mxu0
    %v172 = vadd.f32 0.0, %v171
    %v173 = vpop.f32.mrf.mxu0
    %174 = vdwg.mxu0
    %v176 = vsel %vm97, %v91, 0
    %v179 = vsel %vm101, %v93, 0
    %181 = vmatprep.subr.mxu0 0.0
    %182 = vmatpush1.msra.mxu0 0.0
    %183 = vmatprep.subr.mxu0 0.0
    %184 = vmatpush1.msra.mxu0 0.0
    %185 = vmatprep.subr.mxu0 0.0
    %186 = vmatpush1.msra.mxu0 0.0
    %187 = vmatprep.subr.mxu0 0.0
    %188 = vmatpush1.msra.mxu0 0.0
    %189 = vmatprep.subr.mxu0 0.0
    %190 = vmatpush1.msra.mxu0 0.0
    %191 = vmatprep.subr.mxu0 0.0
    %192 = vmatpush1.msra.mxu0 0.0
    %193 = vmatprep.subr.mxu0 0.0
    %194 = vmatpush1.msra.mxu0 0.0
    %195 = vmatprep.subr.mxu0 0.0
    %196 = vmatpush1.msra.mxu0 0.0
    %197 = vmatprep.subr.mxu0 0.0
    %198 = vmatpush1.msra.mxu0 0.0
    %199 = vmatprep.subr.mxu0 0.0
    %200 = vmatpush1.msra.mxu0 0.0
    %201 = vmatprep.subr.mxu0 0.0
    %202 = vmatpush1.msra.mxu0 0.0
    %203 = vmatprep.subr.mxu0 0.0
    %204 = vmatpush1.msra.mxu0 0.0
    %205 = vmatprep.subr.mxu0 0.0
    %206 = vmatpush1.msra.mxu0 0.0
    %207 = vmatprep.subr.mxu0 0.0
    %208 = vmatpush1.msra.mxu0 0.0
    %209 = vmatprep.subr.mxu0 0.0
    %210 = vmatpush1.msra.mxu0 %v179
    %211 = vmatprep.subr.mxu0 0.0
    %212 = vmatpush1.msra.mxu0 %v92
    %213 = vmatprep.subr.mxu0 0.0
    %214 = vmatpush2.msra.mxu0 0.0
    %215 = vmatprep.subr.mxu0 0.0
    %216 = vmatpush2.msra.mxu0 0.0
    %217 = vmatprep.subr.mxu0 0.0
    %218 = vmatpush2.msra.mxu0 0.0
    %219 = vmatprep.subr.mxu0 0.0
    %220 = vmatpush2.msra.mxu0 0.0
    %221 = vmatprep.subr.mxu0 0.0
    %222 = vmatpush2.msra.mxu0 0.0
    %223 = vmatprep.subr.mxu0 0.0
    %224 = vmatpush2.msra.mxu0 0.0
    %225 = vmatprep.subr.mxu0 0.0
    %226 = vmatpush2.msra.mxu0 0.0
    %227 = vmatprep.subr.mxu0 0.0
    %228 = vmatpush2.msra.mxu0 0.0
    %229 = vmatprep.subr.mxu0 0.0
    %230 = vmatpush2.msra.mxu0 0.0
    %231 = vmatprep.subr.mxu0 0.0
    %232 = vmatpush2.msra.mxu0 0.0
    %233 = vmatprep.subr.mxu0 0.0
    %234 = vmatpush2.msra.mxu0 0.0
    %235 = vmatprep.subr.mxu0 0.0
    %236 = vmatpush2.msra.mxu0 0.0
    %237 = vmatprep.subr.mxu0 0.0
    %238 = vmatpush2.msra.mxu0 0.0
    %239 = vmatprep.subr.mxu0 0.0
    %240 = vmatpush2.msra.mxu0 0.0
    %241 = vmatprep.subr.mxu0 0.0
    %242 = vmatpush2.msra.mxu0 0.0
    %243 = vmatprep.subr.mxu0 0.0
    %244 = vmatpush2.msra.mxu0 0.0
    %245 = vmatprep.mubr.f32.mxu0 0.0
    %246 = vmatmul.mubr.f32.gmra.mxu0 %v176
    %v247 = vpop.f32.mrf.mxu0
    %v248 = vadd.f32 %v172, %v247
    %v249 = vpop.f32.mrf.mxu0
    %250 = vdwg.mxu0
    %v251 = vld [vmem:[%s4] sm:$0x1]
    %v253 = vlaneseq
    %v254 = vshrl.u32 %v253, 7
    %v255 = vsub.s32 0, %v254
    %v256 = vrot.slane %v251, %v255
    %v258 = vadd.f32 %v248, %v256
    %v259 = vmax.f32 %v258, 0.0
    %v260 = vld [vmem:[#allocation10] sm:$0xff]
    %v261 = vld [vmem:[#allocation10 + $0x8] sm:$0xff]
    %v262 = vld [vmem:[#allocation10 + $0x10] sm:$0xff]
    %v263 = vld [vmem:[#allocation10 + $0x18] sm:$0xff]
    %v264 = vld [vmem:[#allocation10 + $0x20] sm:$0xff]
    %v265 = vld [vmem:[#allocation10 + $0x28] sm:$0xff]
    %v266 = vld [vmem:[#allocation10 + $0x30] sm:$0xff]
    %v267 = vld [vmem:[#allocation10 + $0x38] sm:$0xff]
    %v268 = vld [vmem:[%s6] sm:$0x1]
    %v270 = vlaneseq
    %v271 = vshrl.u32 %v270, 7
    %v272 = vsub.s32 0, %v271
    %v273 = vrot.slane %v268, %v272
    %vm275 = vcmask 523264
    %v277 = vsel %vm275, %v259, 0
    %279 = vmatprep.subr.mxu0 0.0
    %280 = vmatpush1.msra.mxu0 0.0
    %281 = vmatprep.subr.mxu0 0.0
    %282 = vmatpush1.msra.mxu0 0.0
    %283 = vmatprep.subr.mxu0 0.0
    %284 = vmatpush1.msra.mxu0 0.0
    %285 = vmatprep.subr.mxu0 0.0
    %286 = vmatpush1.msra.mxu0 0.0
    %287 = vmatprep.subr.mxu0 0.0
    %288 = vmatpush1.msra.mxu0 0.0
    %289 = vmatprep.subr.mxu0 0.0
    %290 = vmatpush1.msra.mxu0 0.0
    %291 = vmatprep.subr.mxu0 0.0
    %292 = vmatpush1.msra.mxu0 0.0
    %293 = vmatprep.subr.mxu0 0.0
    %294 = vmatpush1.msra.mxu0 0.0
    %295 = vmatprep.subr.mxu0 0.0
    %296 = vmatpush1.msra.mxu0 %v267
    %297 = vmatprep.subr.mxu0 0.0
    %298 = vmatpush1.msra.mxu0 %v266
    %299 = vmatprep.subr.mxu0 0.0
    %300 = vmatpush1.msra.mxu0 %v265
    %301 = vmatprep.subr.mxu0 0.0
    %302 = vmatpush1.msra.mxu0 %v264
    %303 = vmatprep.subr.mxu0 0.0
    %304 = vmatpush1.msra.mxu0 %v263
    %305 = vmatprep.subr.mxu0 0.0
    %306 = vmatpush1.msra.mxu0 %v262
    %307 = vmatprep.subr.mxu0 0.0
    %308 = vmatpush1.msra.mxu0 %v261
    %309 = vmatprep.subr.mxu0 0.0
    %310 = vmatpush1.msra.mxu0 %v260
    %311 = vmatprep.subr.mxu0 0.0
    %312 = vmatpush2.msra.mxu0 0.0
    %313 = vmatprep.subr.mxu0 0.0
    %314 = vmatpush2.msra.mxu0 0.0
    %315 = vmatprep.subr.mxu0 0.0
    %316 = vmatpush2.msra.mxu0 0.0
    %317 = vmatprep.subr.mxu0 0.0
    %318 = vmatpush2.msra.mxu0 0.0
    %319 = vmatprep.subr.mxu0 0.0
    %320 = vmatpush2.msra.mxu0 0.0
    %321 = vmatprep.subr.mxu0 0.0
    %322 = vmatpush2.msra.mxu0 0.0
    %323 = vmatprep.subr.mxu0 0.0
    %324 = vmatpush2.msra.mxu0 0.0
    %325 = vmatprep.subr.mxu0 0.0
    %326 = vmatpush2.msra.mxu0 0.0
    %327 = vmatprep.subr.mxu0 0.0
    %328 = vmatpush2.msra.mxu0 0.0
    %329 = vmatprep.subr.mxu0 0.0
    %330 = vmatpush2.msra.mxu0 0.0
    %331 = vmatprep.subr.mxu0 0.0
    %332 = vmatpush2.msra.mxu0 0.0
    %333 = vmatprep.subr.mxu0 0.0
    %334 = vmatpush2.msra.mxu0 0.0
    %335 = vmatprep.subr.mxu0 0.0
    %336 = vmatpush2.msra.mxu0 0.0
    %337 = vmatprep.subr.mxu0 0.0
    %338 = vmatpush2.msra.mxu0 0.0
    %339 = vmatprep.subr.mxu0 0.0
    %340 = vmatpush2.msra.mxu0 0.0
    %341 = vmatprep.subr.mxu0 0.0
    %342 = vmatpush2.msra.mxu0 0.0
    %343 = vmatprep.mubr.f32.mxu0 0.0
    %344 = vmatmul.mubr.f32.gmra.mxu0 %v277
    %v345 = vpop.f32.mrf.mxu0
    %v346 = vadd.f32 %v273, %v345
    %v347 = vpop.f32.mrf.mxu0
    %348 = vdwg.mxu0
    %349 = vst [vmem:[#allocation11] sm:$0xff] %v346
    // Predicated region
    $region50: #{tpu_custom_call.1} parent=1 // pred_check
      _
    $region51: #{tpu_custom_call.1} parent=1 // pred_check_branch
      %351 = sbr.rel (0) target = $region53
    $region52: #{tpu_custom_call.1} parent=1 // pred_region
      %s353 = ssub.s32 128, 128
      %354 = vsyncadd [#allocation4], %s353
      %s356 = sshll.u32 [#allocation11], 4
      %s357 = int_to_ptr.vmem [resolvable:$true] %s356
      %359 = dma.vmem_to_hbm [thread:$0]  %s357, 128, %s7, [#allocation4]
    $region53: #{tpu_custom_call.1} parent=1 // pred_fallthru
      _
    // Predicated region
    $region54: #{tpu_custom_call.1} parent=1 // pred_check
      _
    $region55: #{tpu_custom_call.1} parent=1 // pred_check_branch
      %361 = sbr.rel (0) target = $region57
    $region56: #{tpu_custom_call.1} parent=1 // pred_region
      %362 = dma.done [#allocation4], 128
    $region57: #{tpu_custom_call.1} parent=1 // pred_fallthru
      _
    %363 = vsyncpa [#allocation3], 1
    %364 = vsyncpa [#allocation6], 1
    %365 = vsyncpa [#allocation9], 1
    %366 = vsyncpa [#allocation4], 1

</llo_original>
